<compile_context>
chip_gen: v7x
topology: tpu7x:2x2x1
jax: 0.10.0
libtpu: 0.0.40
codegen_flags: <defaults>
</compile_context>

<pallas_src>
import jax
import jax.numpy as jnp
import numpy as np
from jax.experimental import pallas as pl
from jax.experimental.pallas import tpu as pltpu


def _round_up(x, m):
    return ((x + m - 1) // m) * m


def _fused_matmul_kernel(wc_ref, b_ref, f_ref, out_ref):
    # wc_ref : (N*K, K) f32 fused weight softmax(aw)[n] * W^T   (constant block, VMEM-resident)
    # b_ref  : (1, K)   f32 classifier bias                     (constant block, VMEM-resident)
    # f_ref  : (TM, N*K) lane-dense features tile (row-major view of (TM, N, K))
    # out_ref: (TM, K)  classifier output tile
    acc = jnp.dot(f_ref[...], wc_ref[...], preferred_element_type=jnp.float32)
    out_ref[...] = (acc + b_ref[...]).astype(out_ref.dtype)


def feature_attention_forward(features, attention_weights, w, b, *, tm=8192, out_dtype=None):
    """features: (M, N, K) f32/bf16; attention_weights: (N,); w: (K, K); b: (K,)."""
    M, N, K = features.shape
    NK = N * K
    out_dtype = features.dtype if out_dtype is None else out_dtype

    # --- one-time prep in the wrapper (hoisted out of the kernel per perf review) ---
    # Numerically stable softmax over the model axis (N elements) and fused weight:
    #   Wc[n*K + k, k'] = wts[n] * W[k', k]   so   out = features_2d @ Wc + b.
    wts = jax.nn.softmax(attention_weights.astype(jnp.float32), axis=0)          # (N,)
    wt = jnp.transpose(w).astype(jnp.float32)                                     # (K, K)
    wc = (wts[:, None, None] * wt[None, :, :]).reshape(NK, K)                     # (NK, K) f32
    b2 = b.reshape(1, K).astype(jnp.float32)

    # Lane-dense 2-D view of features; keep the producer's dtype (bf16 halves HBM traffic).
    f2d = features.reshape(M, NK)

    # --- batch tiling: big tiles to amortize per-step overhead, clamped by VMEM budget ---
    f_bytes = jnp.dtype(f2d.dtype).itemsize
    o_bytes = jnp.dtype(out_dtype).itemsize
    per_row = 2 * (NK * f_bytes + K * o_bytes)          # double-buffered in+out bytes per row
    VMEM_BUDGET = 40 * 1024 * 1024                      # safe on v5e/v6e/v7x tiles budget
    max_tm = max(8, (VMEM_BUDGET // per_row) // 8 * 8)
    tm = min(tm, max_tm, _round_up(M, 8))               # sublane-aligned batch tile
    grid = (pl.cdiv(M, tm),)

    compiler_kwargs = dict(dimension_semantics=("parallel",))   # no cross-step state -> parallel
    vmem_est = tm * per_row + (NK * K + K) * 4 + (1 << 20)
    if vmem_est > (16 << 20):
        # v5e's default scoped-VMEM limit is 16 MiB; raise it explicitly for large tiles.
        compiler_kwargs["vmem_limit_bytes"] = int(vmem_est)
    compiler_params = pltpu.CompilerParams(**compiler_kwargs)

    out = pl.pallas_call(
        _fused_matmul_kernel,
        out_shape=jax.ShapeDtypeStruct((M, K), out_dtype),
        grid=grid,
        in_specs=[
            pl.BlockSpec((NK, K), lambda i: (0, 0)),    # fused weight Wc (resident, f32)
            pl.BlockSpec((1, K), lambda i: (0, 0)),     # bias            (resident, f32)
            pl.BlockSpec((tm, NK), lambda i: (i, 0)),   # features tile   (pipelined)
        ],
        out_specs=pl.BlockSpec((tm, K), lambda i: (i, 0)),
        compiler_params=compiler_params,
    )(wc, b2, f2d)
    return out, wts


def _reference(features, attention_weights, w, b):
    wts = jax.nn.softmax(attention_weights, axis=0)
    weighted = jnp.einsum('mnk,n->mk', features.astype(jnp.float32), wts)
    return weighted @ w.T + b, wts


if __name__ == "__main__":
    # Small shapes consistent with the module: M = batch, N = n_models, K = n_classes.
    M, N, K = 48, 4, 32
    key = jax.random.PRNGKey(0)
    k_feat, k_aw, k_w, k_b = jax.random.split(key, 4)

    features = jax.random.normal(k_feat, (M, N, K), dtype=jnp.float32)

    # Deterministic parameter init mirroring the module's __init__ shapes:
    #   attention_weights ~ randn(n_models); Linear(n_classes, n_classes) weight/bias.
    attention_weights = jax.random.normal(k_aw, (N,), dtype=jnp.float32)
    bound = 1.0 / np.sqrt(K)
    w = jax.random.uniform(k_w, (K, K), minval=-bound, maxval=bound, dtype=jnp.float32)
    b = jax.random.uniform(k_b, (K,), minval=-bound, maxval=bound, dtype=jnp.float32)

    # tm=16 -> 3 grid steps: exercises the parallel batch grid, the VMEM-resident
    # fused weight / bias constant blocks, and the pipelined feature tiles.
    out, wts = feature_attention_forward(features, attention_weights, w, b, tm=16)
    out = jax.block_until_ready(out)
    wts = jax.block_until_ready(wts)

    ref_out, ref_wts = _reference(features, attention_weights, w, b)
    np.testing.assert_allclose(np.asarray(wts), np.asarray(ref_wts), rtol=1e-5, atol=1e-6)
    np.testing.assert_allclose(np.asarray(out), np.asarray(ref_out), rtol=1e-4, atol=1e-5)

    print("KERNEL_OK")
</pallas_src>

<mosaic_0001>
module attributes {stable_mosaic.version = 11 : i64} {
  func.func @_fused_matmul_kernel(%arg0: i32, %arg1: memref<128x32xf32, #tpu.memory_space<vmem>>, %arg2: memref<1x32xf32, #tpu.memory_space<vmem>>, %arg3: memref<16x128xf32, #tpu.memory_space<vmem>>, %arg4: memref<16x32xf32, #tpu.memory_space<vmem>>) attributes {dimension_semantics = [#tpu.dimension_semantics<parallel>], iteration_bounds = array<i64: 3>, scalar_prefetch = 0 : i64, scratch_operands = 0 : i64, tpu.core_type = #tpu.core_type<tc>, window_params = [{pipeline_mode = #tpu.pipeline_mode<synchronous>, transform_indices = @transform_0, window_bounds = array<i64: 128, 32>}, {pipeline_mode = #tpu.pipeline_mode<synchronous>, transform_indices = @transform_1, window_bounds = array<i64: 1, 32>}, {transform_indices = @transform_2, window_bounds = array<i64: 16, 128>}, {transform_indices = @transform_3, window_bounds = array<i64: 16, 32>}]} {
    %c0 = arith.constant 0 : index
    %c0_0 = arith.constant 0 : index
    %0 = vector.load %arg3[%c0, %c0_0] : memref<16x128xf32, #tpu.memory_space<vmem>>, vector<16x128xf32>
    %c0_1 = arith.constant 0 : index
    %c0_2 = arith.constant 0 : index
    %1 = vector.load %arg1[%c0_1, %c0_2] : memref<128x32xf32, #tpu.memory_space<vmem>>, vector<128x32xf32>
    %cst = arith.constant dense<0.000000e+00> : vector<16x32xf32>
    %2 = tpu.matmul %0, %1, %cst {dimension_numbers = #tpu.dot_dimension_numbers<[1], [0], [0], [1], [0, 0, 1, 1], [], []>} : vector<16x128xf32>, vector<128x32xf32>, vector<16x32xf32> -> vector<16x32xf32>
    %c0_3 = arith.constant 0 : index
    %c0_4 = arith.constant 0 : index
    %3 = vector.load %arg2[%c0_3, %c0_4] : memref<1x32xf32, #tpu.memory_space<vmem>>, vector<1x32xf32>
    %4 = vector.broadcast %3 : vector<1x32xf32> to vector<16x32xf32>
    %5 = arith.addf %2, %4 : vector<16x32xf32>
    %c0_5 = arith.constant 0 : index
    %c0_6 = arith.constant 0 : index
    %6 = vector.load %arg4[%c0_5, %c0_6] : memref<16x32xf32, #tpu.memory_space<vmem>>, vector<16x32xf32>
    tpu.vector_store %arg4[%c0_5, %c0_6], %5 {strides = array<i32>} : memref<16x32xf32, #tpu.memory_space<vmem>>, vector<16x32xf32>,
    return
  }
  func.func @transform_0(%arg0: i32) -> (i32, i32) {
    %c0_i32 = arith.constant 0 : i32
    %c0_i32_0 = arith.constant 0 : i32
    %c0_i32_1 = arith.constant 0 : i32
    return %c0_i32, %c0_i32_0 : i32, i32
  }
  func.func @transform_1(%arg0: i32) -> (i32, i32) {
    %c0_i32 = arith.constant 0 : i32
    %c0_i32_0 = arith.constant 0 : i32
    %c0_i32_1 = arith.constant 0 : i32
    return %c0_i32, %c0_i32_0 : i32, i32
  }
  func.func @transform_2(%arg0: i32) -> (i32, i32) {
    %c0_i32 = arith.constant 0 : i32
    %c0_i32_0 = arith.constant 0 : i32
    return %arg0, %c0_i32 : i32, i32
  }
  func.func @transform_3(%arg0: i32) -> (i32, i32) {
    %c0_i32 = arith.constant 0 : i32
    %c0_i32_0 = arith.constant 0 : i32
    return %arg0, %c0_i32 : i32, i32
  }
}

</mosaic_0001>

<llo_original>
// kernel: tpu_custom_call.1
$region0: #{tpu_custom_call.1}
  #allocation0 [shape = 'u32[]', space=smem, size = 0x4, offset = 0x4, fixed_abs, tag = 'smem constant byte address 0x4 - core index']
  #allocation1 [shape = 'u32[144,128]{1,0:T(1,128)}', space=vmem, size = 0x12000, scoped, tag = 'internal scratch']
  %s0 = inlined_call_operand.vmem [shape: f32[128,32], index: 0, kind: input, shape index: {}]
  %s1 = inlined_call_operand.vmem [shape: f32[1,32], index: 1, kind: input, shape index: {}]
  %s2 = inlined_call_operand.vmem [shape: f32[48,128], index: 2, kind: input, shape index: {}]
  %s3 = inlined_call_operand.vmem [shape: f32[48,32], index: 3, kind: output, shape index: {}]
  %s4 = sld [smem:[#allocation0]]
  $region45: #{tpu_custom_call.1} parent=0
    _
  %s6 = ssub.s32 1, %s4
  %s7 = scalar_select 0, %s6, %s4
  loop: start=0, step=1, limit=5
  $region2: #{tpu_custom_call.1} parent=0 // loop_pre_header
    _
  $region3: #{tpu_custom_call.1} parent=0 // loop_header
    %s9 = sphi 0, %s13
    %p10 = scmp.ge.s32.totalorder %s9, 5
    %s17 = sphi 0, %s17
    %s19 = sphi 0, %s17
    %s20 = sphi 0, %s19
    %s34 = sphi 0, %s20
    %s38 = sphi 0, %s38
    %s40 = sphi 0, %s38
    %s41 = sphi 0, %s40
    %s55 = sphi 0, %s41
    %s61 = sphi 0, %s63
    %s64 = sphi 0, %s61
    %s65 = sphi 0, %s64
    %s81 = sphi 0, %s65
    %s87 = sphi 0, %s89
    %s90 = sphi 0, %s87
    %s91 = sphi 0, %s90
    %s107 = sphi 0, %s91
  $region4: #{tpu_custom_call.1} parent=0 // loop_header_branch
    %12 = sbr.rel (%p10) target = $region8
  $region5: #{tpu_custom_call.1} parent=0 // loop_body
    %s14 = ssub.s32 %s9, 1
    %s15 = ssub.s32 %s9, 2
    %s16 = sadd.s32 %s9, 1
    %s18 = sadd.s32 %s17, 1
    %p21 = scmp.eq.s32.totalorder %s9, 2
    %p22 = scmp.ne.s32.totalorder %s17, %s19
    %p23 = scmp.eq.s32.totalorder %s9, 0
    %p24 = por %p22, %p23
    %p25 = scmp.ne.s32.totalorder %s17, %s19
    %p26 = scmp.eq.s32.totalorder %s14, 2
    %p27 = por %p25, %p26
    %p28 = scmp.ne.s32.totalorder %s19, %s20
    %p29 = scmp.eq.s32.totalorder %s14, 0
    %p30 = por %p28, %p29
    %p31 = scmp.ne.s32.totalorder %s19, %s20
    %p32 = scmp.eq.s32.totalorder %s15, 2
    %p33 = por %p31, %p32
    %p35 = scmp.ne.s32.totalorder %s20, %s34
    %p36 = scmp.eq.s32.totalorder %s15, 0
    %p37 = por %p35, %p36
    %s39 = sadd.s32 %s38, 1
    %p42 = scmp.eq.s32.totalorder %s9, 2
    %p43 = scmp.ne.s32.totalorder %s38, %s40
    %p44 = scmp.eq.s32.totalorder %s9, 0
    %p45 = por %p43, %p44
    %p46 = scmp.ne.s32.totalorder %s38, %s40
    %p47 = scmp.eq.s32.totalorder %s14, 2
    %p48 = por %p46, %p47
    %p49 = scmp.ne.s32.totalorder %s40, %s41
    %p50 = scmp.eq.s32.totalorder %s14, 0
    %p51 = por %p49, %p50
    %p52 = scmp.ne.s32.totalorder %s40, %s41
    %p53 = scmp.eq.s32.totalorder %s15, 2
    %p54 = por %p52, %p53
    %p56 = scmp.ne.s32.totalorder %s41, %s55
    %p57 = scmp.eq.s32.totalorder %s15, 0
    %p58 = por %p56, %p57
    %s59 = ssub.s32 %s9, %s16
    %p60 = scmp.eq.s32.totalorder %s59, 0
    %s62 = sadd.s32 %s61, 1
    %s63 = scalar_select %p60, %s61, %s62
    %p66 = pneg %p60
    %p67 = scmp.eq.s32.totalorder %s9, 2
    %p68 = por %p66, %p67
    %p69 = scmp.ne.s32.totalorder %s61, %s64
    %p70 = scmp.eq.s32.totalorder %s9, 0
    %p71 = por %p69, %p70
    %p72 = scmp.ne.s32.totalorder %s61, %s64
    %p73 = scmp.eq.s32.totalorder %s14, 2
    %p74 = por %p72, %p73
    %p75 = scmp.ne.s32.totalorder %s64, %s65
    %p76 = scmp.eq.s32.totalorder %s14, 0
    %p77 = por %p75, %p76
    %p78 = scmp.ne.s32.totalorder %s64, %s65
    %p79 = scmp.eq.s32.totalorder %s15, 2
    %p80 = por %p78, %p79
    %p82 = scmp.ne.s32.totalorder %s65, %s81
    %p83 = scmp.eq.s32.totalorder %s15, 0
    %p84 = por %p82, %p83
    %s85 = ssub.s32 %s9, %s16
    %p86 = scmp.eq.s32.totalorder %s85, 0
    %s88 = sadd.s32 %s87, 1
    %s89 = scalar_select %p86, %s87, %s88
    %p92 = pneg %p86
    %p93 = scmp.eq.s32.totalorder %s9, 2
    %p94 = por %p92, %p93
    %p95 = scmp.ne.s32.totalorder %s87, %s90
    %p96 = scmp.eq.s32.totalorder %s9, 0
    %p97 = por %p95, %p96
    %p98 = scmp.ne.s32.totalorder %s87, %s90
    %p99 = scmp.eq.s32.totalorder %s14, 2
    %p100 = por %p98, %p99
    %p101 = scmp.ne.s32.totalorder %s90, %s91
    %p102 = scmp.eq.s32.totalorder %s14, 0
    %p103 = por %p101, %p102
    %p104 = scmp.ne.s32.totalorder %s90, %s91
    %p105 = scmp.eq.s32.totalorder %s15, 2
    %p106 = por %p104, %p105
    %p108 = scmp.ne.s32.totalorder %s91, %s107
    %p109 = scmp.eq.s32.totalorder %s15, 0
    %p110 = por %p108, %p109
    %p111 = scmp.le.s32.totalorder 1, %s9
    %p112 = scmp.lt.s32.totalorder %s9, 4
    %p113 = pnand %p111, %p112
    %p114 = pneg %p113
    // Predicated region
    $region9: #{tpu_custom_call.1} parent=5 // pred_check
      _
    $region10: #{tpu_custom_call.1} parent=5 // pred_check_branch
      %116 = sbr.rel (%p113) target = $region12
    $region11: #{tpu_custom_call.1} parent=5 // pred_region
      %s117 = ssub.s32 %s9, 1
      // Predicated region
      $region13: #{tpu_custom_call.1} parent=11 // pred_check
        %p118 = pneg %p30
      $region14: #{tpu_custom_call.1} parent=11 // pred_check_branch
        %120 = sbr.rel (%p118) target = $region16
      $region15: #{tpu_custom_call.1} parent=11 // pred_region
        _
      $region16: #{tpu_custom_call.1} parent=11 // pred_fallthru
        _
      // Predicated region
      $region17: #{tpu_custom_call.1} parent=11 // pred_check
        %p121 = pneg %p51
      $region18: #{tpu_custom_call.1} parent=11 // pred_check_branch
        %123 = sbr.rel (%p121) target = $region20
      $region19: #{tpu_custom_call.1} parent=11 // pred_region
        _
      $region20: #{tpu_custom_call.1} parent=11 // pred_fallthru
        _
    $region12: #{tpu_custom_call.1} parent=5 // pred_fallthru
      _
    %p124 = scmp.lt.s32.totalorder %s9, 3
    // Predicated region
    $region21: #{tpu_custom_call.1} parent=5 // pred_check
      %p125 = pneg %p124
    $region22: #{tpu_custom_call.1} parent=5 // pred_check_branch
      %127 = sbr.rel (%p125) target = $region24
    $region23: #{tpu_custom_call.1} parent=5 // pred_region
      // Predicated region
      $region25: #{tpu_custom_call.1} parent=23 // pred_check
        %p128 = pneg %p71
      $region26: #{tpu_custom_call.1} parent=23 // pred_check_branch
        %130 = sbr.rel (%p128) target = $region28
      $region27: #{tpu_custom_call.1} parent=23 // pred_region
        %s131 = smul.u32 2, %s9
        %p132 = scmp.lt.s32.totalorder %s131, 5
        %s133 = scalar_select %p132, %s131, 5
        %s134 = smul.addr %s133, 8
        %s135 = scalar_lea.vmem %s2, %s134
        %s136 = smul.u32 2, %s9
      $region28: #{tpu_custom_call.1} parent=23 // pred_fallthru
        _
    $region24: #{tpu_custom_call.1} parent=5 // pred_fallthru
      _
    %p137 = scmp.le.s32.totalorder 1, %s9
    %p138 = scmp.lt.s32.totalorder %s9, 4
    %p139 = pnand %p137, %p138
    %p140 = pneg %p139
    // Predicated region
    $region29: #{tpu_custom_call.1} parent=5 // pred_check
      _
    $region30: #{tpu_custom_call.1} parent=5 // pred_check_branch
      %142 = sbr.rel (%p139) target = $region32
    $region31: #{tpu_custom_call.1} parent=5 // pred_region
      %s143 = ssub.s32 %s9, 1
      %p144 = pneg %p30
      %p145 = pneg %p27
      %p146 = pneg %p51
      %p147 = pneg %p48
      %s148 = smul.u32 2, %s14
      %p149 = scmp.lt.s32.totalorder %s148, 5
      %s150 = scalar_select %p149, %s148, 5
      %s151 = smul.addr %s150, 8
      %s152 = scalar_lea.vmem %s2, %s151
      %p153 = pneg %p77
      %p154 = pneg %p74
      %p155 = pneg %p103
      %p156 = pneg %p100
      %s157 = smul.u32 2, %s14
      %p158 = scmp.lt.s32.totalorder %s157, 5
      %s159 = scalar_select %p158, %s157, 5
      %s160 = smul.addr %s159, 8
      %s161 = scalar_lea.vmem %s3, %s160
      %s162 = smul.u32 2, %s14
      %p163 = scmp.lt.s32.totalorder %s162, 5
      %s164 = scalar_select %p163, %s162, 5
      %s165 = smul.addr %s164, 8
      %s166 = scalar_lea.vmem %s2, %s165
      %s167 = smul.u32 2, %s14
      %s168 = smul.u32 2, %s14
      %p169 = scmp.lt.s32.totalorder %s168, 5
      %s170 = scalar_select %p169, %s168, 5
      %s171 = smul.addr %s170, 8
      %s172 = scalar_lea.vmem %s3, %s171
      %s173 = smul.u32 2, %s14
      %v174 = vld [vmem:[%s166] sm:$0xff]
      %v175 = vld [vmem:[%s166 + $0x8] sm:$0xff]
      %v176 = vld [vmem:[%s0] sm:$0xff]
      %v177 = vld [vmem:[%s0 + $0x8] sm:$0xff]
      %v178 = vld [vmem:[%s0 + $0x10] sm:$0xff]
      %v179 = vld [vmem:[%s0 + $0x18] sm:$0xff]
      %v180 = vld [vmem:[%s0 + $0x20] sm:$0xff]
      %v181 = vld [vmem:[%s0 + $0x28] sm:$0xff]
      %v182 = vld [vmem:[%s0 + $0x30] sm:$0xff]
      %v183 = vld [vmem:[%s0 + $0x38] sm:$0xff]
      %v184 = vld [vmem:[%s0 + $0x40] sm:$0xff]
      %v185 = vld [vmem:[%s0 + $0x48] sm:$0xff]
      %v186 = vld [vmem:[%s0 + $0x50] sm:$0xff]
      %v187 = vld [vmem:[%s0 + $0x58] sm:$0xff]
      %v188 = vld [vmem:[%s0 + $0x60] sm:$0xff]
      %v189 = vld [vmem:[%s0 + $0x68] sm:$0xff]
      %v190 = vld [vmem:[%s0 + $0x70] sm:$0xff]
      %v191 = vld [vmem:[%s0 + $0x78] sm:$0xff]
      %v192 = vld [vmem:[%s1] sm:$0x1]
      %v194 = vlaneseq
      %v195 = vshrl.u32 %v194, 7
      %v196 = vsub.s32 0, %v195
      %v197 = vrot.slane %v192, %v196
      %199 = vmatprep.subr.mxu0 0.0
      %200 = vmatpush1.msra.mxu0 %v176
      %201 = vmatprep.subr.mxu0 0.0
      %202 = vmatpush1.msra.mxu0 %v177
      %203 = vmatprep.subr.mxu0 0.0
      %204 = vmatpush1.msra.mxu0 %v178
      %205 = vmatprep.subr.mxu0 0.0
      %206 = vmatpush1.msra.mxu0 %v179
      %207 = vmatprep.subr.mxu0 0.0
      %208 = vmatpush1.msra.mxu0 %v180
      %209 = vmatprep.subr.mxu0 0.0
      %210 = vmatpush1.msra.mxu0 %v181
      %211 = vmatprep.subr.mxu0 0.0
      %212 = vmatpush1.msra.mxu0 %v182
      %213 = vmatprep.subr.mxu0 0.0
      %214 = vmatpush1.msra.mxu0 %v183
      %215 = vmatprep.subr.mxu0 0.0
      %216 = vmatpush1.msra.mxu0 %v184
      %217 = vmatprep.subr.mxu0 0.0
      %218 = vmatpush1.msra.mxu0 %v185
      %219 = vmatprep.subr.mxu0 0.0
      %220 = vmatpush1.msra.mxu0 %v186
      %221 = vmatprep.subr.mxu0 0.0
      %222 = vmatpush1.msra.mxu0 %v187
      %223 = vmatprep.subr.mxu0 0.0
      %224 = vmatpush1.msra.mxu0 %v188
      %225 = vmatprep.subr.mxu0 0.0
      %226 = vmatpush1.msra.mxu0 %v189
      %227 = vmatprep.subr.mxu0 0.0
      %228 = vmatpush1.msra.mxu0 %v190
      %229 = vmatprep.subr.mxu0 0.0
      %230 = vmatpush1.msra.mxu0 %v191
      %231 = vmatprep.subr.mxu0 0.0
      %232 = vmatpush1.msra.mxu0 0.0
      %233 = vmatprep.subr.mxu0 0.0
      %234 = vmatpush1.msra.mxu0 0.0
      %235 = vmatprep.subr.mxu0 0.0
      %236 = vmatpush1.msra.mxu0 0.0
      %237 = vmatprep.subr.mxu0 0.0
      %238 = vmatpush1.msra.mxu0 0.0
      %239 = vmatprep.subr.mxu0 0.0
      %240 = vmatpush1.msra.mxu0 0.0
      %241 = vmatprep.subr.mxu0 0.0
      %242 = vmatpush1.msra.mxu0 0.0
      %243 = vmatprep.subr.mxu0 0.0
      %244 = vmatpush1.msra.mxu0 0.0
      %245 = vmatprep.subr.mxu0 0.0
      %246 = vmatpush1.msra.mxu0 0.0
      %247 = vmatprep.subr.mxu0 0.0
      %248 = vmatpush1.msra.mxu0 0.0
      %249 = vmatprep.subr.mxu0 0.0
      %250 = vmatpush1.msra.mxu0 0.0
      %251 = vmatprep.subr.mxu0 0.0
      %252 = vmatpush1.msra.mxu0 0.0
      %253 = vmatprep.subr.mxu0 0.0
      %254 = vmatpush1.msra.mxu0 0.0
      %255 = vmatprep.subr.mxu0 0.0
      %256 = vmatpush1.msra.mxu0 0.0
      %257 = vmatprep.subr.mxu0 0.0
      %258 = vmatpush1.msra.mxu0 0.0
      %259 = vmatprep.subr.mxu0 0.0
      %260 = vmatpush1.msra.mxu0 0.0
      %261 = vmatprep.subr.mxu0 0.0
      %262 = vmatpush1.msra.mxu0 0.0
      %263 = vmatprep.mubr.f32.mxu0 0.0
      %264 = vmatmul.mubr.f32.gmra.mrb[0].mxu0 %v174
      %v265 = vpop.f32.mrb[0].mxu0
      %v266 = vadd.f32 %v197, %v265
      %v267 = vpop.f32.mrb[0].mxu0
      %268 = vmatprep.mubr.f32.mxu0 0.0
      %269 = vmatmul.mubr.f32.gmra.mrb[0].mxu0 %v175
      %v270 = vpop.f32.mrb[0].mxu0
      %v271 = vadd.f32 %v197, %v270
      %v272 = vpop.f32.mrb[0].mxu0
      %273 = vdwg.mxu0
      %vm274 = vcmask 261120
      %275 = vst.msk [vmem:[%s172] sm:$0xff] %vm274, %v266
      %276 = vst.msk [vmem:[%s172 + $0x8] sm:$0xff] %vm274, %v271
      %s277 = smul.u32 2, %s14
      %p278 = scmp.lt.s32.totalorder %s277, 5
      %s279 = scalar_select %p278, %s277, 5
      %s280 = smul.addr %s279, 8
      %s281 = scalar_lea.vmem %s3, %s280
      // Predicated region
      $region33: #{tpu_custom_call.1} parent=31 // pred_check
        %p282 = pneg %p100
      $region34: #{tpu_custom_call.1} parent=31 // pred_check_branch
        %284 = sbr.rel (%p282) target = $region36
      $region35: #{tpu_custom_call.1} parent=31 // pred_region
        %s285 = smul.u32 2, %s14
      $region36: #{tpu_custom_call.1} parent=31 // pred_fallthru
        _
    $region32: #{tpu_custom_call.1} parent=5 // pred_fallthru
      _
    %p286 = scmp.le.s32.totalorder 2, %s9
    // Predicated region
    $region37: #{tpu_custom_call.1} parent=5 // pred_check
      %p287 = pneg %p286
    $region38: #{tpu_custom_call.1} parent=5 // pred_check_branch
      %289 = sbr.rel (%p287) target = $region40
    $region39: #{tpu_custom_call.1} parent=5 // pred_region
      %s290 = ssub.s32 %s9, 2
      // Predicated region
      $region41: #{tpu_custom_call.1} parent=39 // pred_check
        %p291 = pneg %p106
      $region42: #{tpu_custom_call.1} parent=39 // pred_check_branch
        %293 = sbr.rel (%p291) target = $region44
      $region43: #{tpu_custom_call.1} parent=39 // pred_region
        %s294 = smul.u32 2, %s15
        %p295 = scmp.lt.s32.totalorder %s294, 5
        %s296 = scalar_select %p295, %s294, 5
        %s297 = smul.addr %s296, 8
        %s298 = scalar_lea.vmem %s3, %s297
      $region44: #{tpu_custom_call.1} parent=39 // pred_fallthru
        _
    $region40: #{tpu_custom_call.1} parent=5 // pred_fallthru
      _
  $region6: #{tpu_custom_call.1} parent=0 // loop_footer
    %s13 = sadd.s32 1, %s9
  $region7: #{tpu_custom_call.1} parent=0 // loop_footer_branch
    %8 = sbr.rel target = $region3
  $region8: #{tpu_custom_call.1} parent=0 // loop_exit
    _

</llo_original>
